<compile_context>
chip_gen: v7x
topology: tpu7x:2x2x1
jax: 0.10.0
libtpu: 0.0.40
codegen_flags: <defaults>
</compile_context>

<pallas_src>
import jax
import jax.numpy as jnp
from jax.experimental import pallas as pl
from jax.experimental.pallas import tpu as pltpu


def _round_up(n, m):
    return ((n + m - 1) // m) * m


# --------------------------------------------------------------------------- #
# Kernel
# --------------------------------------------------------------------------- #
def _ts_kernel(bias_smem,          # (1, 1) f32 in SMEM: b2 + b4 + bias folded
               x_ref,              # (tile_b, D_pad) f32
               w1_ref,             # (D_pad, H_pad) bf16   fused trend|season layer-1
               b1_ref,             # (1, H_pad)     f32    fused layer-1 bias
               w2_ref,             # (1, H_pad)     f32    fused layer-2 weights (row)
               o_ref):             # (tile_b, 1)    f32
    x = x_ref[...].astype(jnp.bfloat16)
    # Fused layer 1 for both branches: one MXU pass, f32 accumulation.
    h = jnp.dot(x, w1_ref[...], preferred_element_type=jnp.float32) + b1_ref[...]
    h = jnp.maximum(h, 0.0)
    # Fused layer 2 (output width 1): VPU multiply + lane reduction instead of a
    # padded MXU pass.  Zero-padded hidden columns contribute exactly 0.
    y = jnp.sum(h * w2_ref[...], axis=-1, keepdims=True)          # (tile_b, 1)
    # NOTE: output is a (tile_b, 1) column (masked store); lane-dense output only
    # pays off for very large batch tiles, negligible here.
    o_ref[...] = y + bias_smem[0, 0]


# --------------------------------------------------------------------------- #
# Param packing (done once, not per forward call)
# --------------------------------------------------------------------------- #
def pack_params(raw, input_size, trend_size, season_size):
    """Fuse + pad + downcast the raw (pre-transposed) PyTorch-style params."""
    D_pad = _round_up(max(input_size, 1), 128)
    H = trend_size + season_size
    H_pad = _round_up(max(H, 1), 128)

    w_cat = jnp.concatenate([raw["w1"], raw["w3"]], axis=1)            # (D, H)
    b_cat = jnp.concatenate([raw["b1"], raw["b3"]], axis=1)            # (1, H)
    w2_row = jnp.concatenate([raw["w2"][:, 0], raw["w4"][:, 0]])[None, :]  # (1, H)

    # Zero-pad so padded hidden units / padded features contribute nothing.
    w_cat = jnp.pad(w_cat, ((0, D_pad - input_size), (0, H_pad - H)))
    b_cat = jnp.pad(b_cat, ((0, 0), (0, H_pad - H)))
    w2_row = jnp.pad(w2_row, ((0, 0), (0, H_pad - H)))

    scalar = (raw["b2"][0, 0] + raw["b4"][0, 0] + raw["bias"][0, 0]).reshape(1, 1)

    return {
        "w_cat": w_cat.astype(jnp.bfloat16),        # bf16 weight DMA (bandwidth)
        "b_cat": b_cat.astype(jnp.float32),
        "w2_row": w2_row.astype(jnp.float32),
        "scalar": scalar.astype(jnp.float32),
        "input_size": input_size,
        "D_pad": D_pad,
        "H_pad": H_pad,
    }


# --------------------------------------------------------------------------- #
# Forward wrapper
# --------------------------------------------------------------------------- #
def time_series_forward(x, packed, *, tile_b=None):
    B, D = x.shape
    assert D == packed["input_size"]
    D_pad, H_pad = packed["D_pad"], packed["H_pad"]

    if tile_b is None:
        tile_b = min(_round_up(B, 8), 512)
    tile_b = _round_up(max(tile_b, 8), 8)
    B_pad = _round_up(B, tile_b)
    num_tiles = B_pad // tile_b

    # Zero-pad batch and feature dims (padded rows are sliced off afterwards).
    x_p = jnp.pad(x.astype(jnp.float32), ((0, B_pad - B), (0, D_pad - D)))

    out = pl.pallas_call(
        _ts_kernel,
        out_shape=jax.ShapeDtypeStruct((B_pad, 1), jnp.float32),
        grid_spec=pltpu.PrefetchScalarGridSpec(
            num_scalar_prefetch=0,
            grid=(num_tiles,),
            in_specs=[
                # folded scalar bias in SMEM
                pl.BlockSpec(memory_space=pltpu.MemorySpace.SMEM),
                # batch-tiled X (double-buffered by the pipeline)
                pl.BlockSpec((tile_b, D_pad), lambda i: (i, 0)),
                # weights: constant index_map -> stay resident across grid steps
                pl.BlockSpec((D_pad, H_pad), lambda i: (0, 0)),
                pl.BlockSpec((1, H_pad), lambda i: (0, 0)),
                pl.BlockSpec((1, H_pad), lambda i: (0, 0)),
            ],
            out_specs=pl.BlockSpec((tile_b, 1), lambda i: (i, 0)),
        ),
        compiler_params=pltpu.CompilerParams(
            dimension_semantics=("parallel",),          # shards batch on v7x's 2 TCs
            vmem_limit_bytes=48 * 1024 * 1024,          # > v5e's 16 MiB default,
                                                        # < v7x's 64 MiB physical
        ),
    )(packed["scalar"], x_p, packed["w_cat"], packed["b_cat"], packed["w2_row"])

    return out[:B]


# --------------------------------------------------------------------------- #
# Test harness
# --------------------------------------------------------------------------- #
def _init_raw_params(key, input_size, trend_size, season_size):
    ks = jax.random.split(key, 9)
    scale = 0.05
    # Stored already transposed to (in, out); biases as (1, out) row vectors.
    return {
        "w1": scale * jax.random.normal(ks[0], (input_size, trend_size), jnp.float32),
        "b1": scale * jax.random.normal(ks[1], (1, trend_size), jnp.float32),
        "w2": scale * jax.random.normal(ks[2], (trend_size, 1), jnp.float32),
        "b2": scale * jax.random.normal(ks[3], (1, 1), jnp.float32),
        "w3": scale * jax.random.normal(ks[4], (input_size, season_size), jnp.float32),
        "b3": scale * jax.random.normal(ks[5], (1, season_size), jnp.float32),
        "w4": scale * jax.random.normal(ks[6], (season_size, 1), jnp.float32),
        "b4": scale * jax.random.normal(ks[7], (1, 1), jnp.float32),
        "bias": jax.random.normal(ks[8], (1, 1), jnp.float32),
    }


def _reference(x, p):
    h_t = jnp.maximum(x @ p["w1"] + p["b1"], 0.0)
    trend = h_t @ p["w2"] + p["b2"]
    h_s = jnp.maximum(x @ p["w3"] + p["b3"], 0.0)
    season = h_s @ p["w4"] + p["b4"]
    return trend + season + p["bias"]


if __name__ == "__main__":
    # Small, deliberately non-128-aligned shapes (original: 5 x 1000, 500, 300) to
    # exercise the padding path; B=20 with tile_b=8 exercises a 3-step batch grid.
    B, INPUT_SIZE, TREND_SIZE, SEASON_SIZE = 20, 100, 48, 40

    key = jax.random.PRNGKey(0)
    kx, kp = jax.random.split(key)
    x = jax.random.normal(kx, (B, INPUT_SIZE), jnp.float32)
    raw = _init_raw_params(kp, INPUT_SIZE, TREND_SIZE, SEASON_SIZE)

    packed = pack_params(raw, INPUT_SIZE, TREND_SIZE, SEASON_SIZE)

    out = time_series_forward(x, packed, tile_b=8)
    out = jax.block_until_ready(out)

    ref = _reference(x, raw)
    assert out.shape == (B, 1)
    # bf16 weight storage (f32 accumulate) -> slightly loosened tolerance.
    assert jnp.allclose(out, ref, atol=2e-2, rtol=2e-2), "mismatch vs JAX reference"

    print("KERNEL_OK")
</pallas_src>

<mosaic_0001>
module attributes {stable_mosaic.version = 11 : i64} {
  func.func @_ts_kernel(%arg0: i32, %arg1: memref<1x1xf32, #tpu.memory_space<smem>>, %arg2: memref<8x128xf32, #tpu.memory_space<vmem>>, %arg3: memref<128x128xbf16, #tpu.memory_space<vmem>>, %arg4: memref<1x128xf32, #tpu.memory_space<vmem>>, %arg5: memref<1x128xf32, #tpu.memory_space<vmem>>, %arg6: memref<8x1xf32, #tpu.memory_space<vmem>>) attributes {dimension_semantics = [#tpu.dimension_semantics<parallel>], iteration_bounds = array<i64: 3>, scalar_prefetch = 0 : i64, scratch_operands = 0 : i64, tpu.core_type = #tpu.core_type<tc>, window_params = [{transform_indices = @transform_0, window_bounds = array<i64: 1, 1>}, {transform_indices = @transform_1, window_bounds = array<i64: 8, 128>}, {pipeline_mode = #tpu.pipeline_mode<synchronous>, transform_indices = @transform_2, window_bounds = array<i64: 128, 128>}, {pipeline_mode = #tpu.pipeline_mode<synchronous>, transform_indices = @transform_3, window_bounds = array<i64: 1, 128>}, {pipeline_mode = #tpu.pipeline_mode<synchronous>, transform_indices = @transform_4, window_bounds = array<i64: 1, 128>}, {transform_indices = @transform_5, window_bounds = array<i64: 8, 1>}]} {
    %c0 = arith.constant 0 : index
    %c0_0 = arith.constant 0 : index
    %0 = vector.load %arg2[%c0, %c0_0] : memref<8x128xf32, #tpu.memory_space<vmem>>, vector<8x128xf32>
    %1 = arith.truncf %0 : vector<8x128xf32> to vector<8x128xbf16>
    %c0_1 = arith.constant 0 : index
    %c0_2 = arith.constant 0 : index
    %2 = vector.load %arg3[%c0_1, %c0_2] : memref<128x128xbf16, #tpu.memory_space<vmem>>, vector<128x128xbf16>
    %cst = arith.constant dense<0.000000e+00> : vector<8x128xf32>
    %3 = tpu.matmul %1, %2, %cst {dimension_numbers = #tpu.dot_dimension_numbers<[1], [0], [0], [1], [0, 0, 1, 1], [], []>} : vector<8x128xbf16>, vector<128x128xbf16>, vector<8x128xf32> -> vector<8x128xf32>
    %c0_3 = arith.constant 0 : index
    %c0_4 = arith.constant 0 : index
    %4 = vector.load %arg4[%c0_3, %c0_4] : memref<1x128xf32, #tpu.memory_space<vmem>>, vector<1x128xf32>
    %5 = vector.broadcast %4 : vector<1x128xf32> to vector<8x128xf32>
    %6 = arith.addf %3, %5 : vector<8x128xf32>
    %cst_5 = arith.constant 0.000000e+00 : f32
    %7 = vector.broadcast %cst_5 : f32 to vector<8x128xf32>
    %8 = arith.maximumf %6, %7 : vector<8x128xf32>
    %c0_6 = arith.constant 0 : index
    %c0_7 = arith.constant 0 : index
    %9 = vector.load %arg5[%c0_6, %c0_7] : memref<1x128xf32, #tpu.memory_space<vmem>>, vector<1x128xf32>
    %10 = vector.broadcast %9 : vector<1x128xf32> to vector<8x128xf32>
    %11 = arith.mulf %8, %10 : vector<8x128xf32>
    %cst_8 = arith.constant dense<0.000000e+00> : vector<8xf32>
    %12 = vector.multi_reduction <add>, %11, %cst_8 [1] : vector<8x128xf32> to vector<8xf32>
    %13 = vector.shape_cast %12 : vector<8xf32> to vector<8x1xf32>
    %c0_9 = arith.constant 0 : index
    %c0_10 = arith.constant 0 : index
    %14 = memref.load %arg1[%c0_9, %c0_10] : memref<1x1xf32, #tpu.memory_space<smem>>
    %15 = vector.broadcast %14 : f32 to vector<8x1xf32>
    %16 = arith.addf %13, %15 : vector<8x1xf32>
    %c0_11 = arith.constant 0 : index
    %c0_12 = arith.constant 0 : index
    %17 = vector.load %arg6[%c0_11, %c0_12] : memref<8x1xf32, #tpu.memory_space<vmem>>, vector<8x1xf32>
    tpu.vector_store %arg6[%c0_11, %c0_12], %16 {strides = array<i32>} : memref<8x1xf32, #tpu.memory_space<vmem>>, vector<8x1xf32>,
    return
  }
  func.func @transform_0(%arg0: i32) -> (i32, i32) {
    %c0_i32 = arith.constant 0 : i32
    %c0_i32_0 = arith.constant 0 : i32
    %c0_i32_1 = arith.constant 0 : i32
    return %c0_i32, %c0_i32_0 : i32, i32
  }
  func.func @transform_1(%arg0: i32) -> (i32, i32) {
    %c0_i32 = arith.constant 0 : i32
    %c0_i32_0 = arith.constant 0 : i32
    return %arg0, %c0_i32 : i32, i32
  }
  func.func @transform_2(%arg0: i32) -> (i32, i32) {
    %c0_i32 = arith.constant 0 : i32
    %c0_i32_0 = arith.constant 0 : i32
    %c0_i32_1 = arith.constant 0 : i32
    return %c0_i32, %c0_i32_0 : i32, i32
  }
  func.func @transform_3(%arg0: i32) -> (i32, i32) {
    %c0_i32 = arith.constant 0 : i32
    %c0_i32_0 = arith.constant 0 : i32
    %c0_i32_1 = arith.constant 0 : i32
    return %c0_i32, %c0_i32_0 : i32, i32
  }
  func.func @transform_4(%arg0: i32) -> (i32, i32) {
    %c0_i32 = arith.constant 0 : i32
    %c0_i32_0 = arith.constant 0 : i32
    %c0_i32_1 = arith.constant 0 : i32
    return %c0_i32, %c0_i32_0 : i32, i32
  }
  func.func @transform_5(%arg0: i32) -> (i32, i32) {
    %c0_i32 = arith.constant 0 : i32
    %c0_i32_0 = arith.constant 0 : i32
    return %arg0, %c0_i32 : i32, i32
  }
}

</mosaic_0001>

<llo_original>
// kernel: tpu_custom_call.1
$region0: #{tpu_custom_call.1}
  #allocation0 [shape = 'u32[]', space=smem, size = 0x4, offset = 0x4, fixed_abs, tag = 'smem constant byte address 0x4 - core index']
  #allocation1 [shape = 'u32[144,128]{1,0:T(1,128)}', space=vmem, size = 0x12000, scoped, tag = 'internal scratch']
  #allocation2 [shape = 'f32[1,1]{1,0:T(1,128)S(6)}', space=smem, size = 0x200, scoped, tag = 'scoped memory for tpu_custom_call.1']
  %s0 = inlined_call_operand.<no memory space> [shape: f32[1,1], index: 0, kind: input, shape index: {}]
  %s1 = inlined_call_operand.hbm [shape: f32[24,128], index: 1, kind: input, shape index: {}]
  %s2 = inlined_call_operand.hbm [shape: bf16[128,128], index: 2, kind: input, shape index: {}]
  %s3 = inlined_call_operand.vmem [shape: f32[1,128], index: 3, kind: input, shape index: {}]
  %s4 = inlined_call_operand.vmem [shape: f32[1,128], index: 4, kind: input, shape index: {}]
  %s5 = inlined_call_operand.vmem [shape: f32[24,1], index: 5, kind: output, shape index: {}]
  %s6 = sld [smem:[#allocation0]]
  $region61: #{tpu_custom_call.1} parent=0
    _
  %s8 = ssub.s32 1, %s6
  %s9 = scalar_select 0, %s8, %s6
  %10 = sst [smem:[#allocation2]] %s0
  $region1: #{tpu_custom_call.1} parent=0
    #allocation3 [shape = 'u8[8192]{0}', space=vmem, size = 0x2000, scoped, tag = 'input window, operand 1']
    #allocation4 [shape = 's32[2]{0}', space=sflag, size = 0x8, scoped, tag = 'scoped memory for tpu_custom_call.1']
    #allocation5 [shape = 'u8[32768]{0}', space=vmem, size = 0x8000, scoped, tag = 'input window, operand 2, single buffered']
    #allocation6 [shape = 's32[1]{0}', space=sflag, size = 0x4, scoped, tag = 'scoped memory for tpu_custom_call.1']
    %11 = vsyncpa [#allocation4], 0
    %s12 = scalar_lea.sflag [#allocation4], 1
    %13 = vsyncpa %s12, 0
    %14 = vsyncpa [#allocation6], 0
    loop: start=0, step=1, limit=5
    $region2: #{tpu_custom_call.1} parent=1 // loop_pre_header
      _
    $region3: #{tpu_custom_call.1} parent=1 // loop_header
      %s16 = sphi 0, %s20
      %p17 = scmp.ge.s32.totalorder %s16, 5
      %s24 = sphi 0, %s24
      %s26 = sphi 0, %s24
      %s27 = sphi 0, %s26
      %s41 = sphi 0, %s27
      %s47 = sphi 0, %s49
      %s50 = sphi 0, %s47
      %s51 = sphi 0, %s50
      %s67 = sphi 0, %s51
      %s71 = sphi 0, %s71
      %s73 = sphi 0, %s71
      %s74 = sphi 0, %s73
      %s88 = sphi 0, %s74
      %s92 = sphi 0, %s92
      %s94 = sphi 0, %s92
      %s95 = sphi 0, %s94
      %s109 = sphi 0, %s95
      %s113 = sphi 0, %s113
      %s115 = sphi 0, %s113
      %s116 = sphi 0, %s115
      %s130 = sphi 0, %s116
      %s136 = sphi 0, %s138
      %s139 = sphi 0, %s136
      %s140 = sphi 0, %s139
      %s156 = sphi 0, %s140
    $region4: #{tpu_custom_call.1} parent=1 // loop_header_branch
      %19 = sbr.rel (%p17) target = $region8
    $region5: #{tpu_custom_call.1} parent=1 // loop_body
      %s21 = ssub.s32 %s16, 1
      %s22 = ssub.s32 %s16, 2
      %s23 = sadd.s32 %s16, 1
      %s25 = sadd.s32 %s24, 1
      %p28 = scmp.eq.s32.totalorder %s16, 2
      %p29 = scmp.ne.s32.totalorder %s24, %s26
      %p30 = scmp.eq.s32.totalorder %s16, 0
      %p31 = por %p29, %p30
      %p32 = scmp.ne.s32.totalorder %s24, %s26
      %p33 = scmp.eq.s32.totalorder %s21, 2
      %p34 = por %p32, %p33
      %p35 = scmp.ne.s32.totalorder %s26, %s27
      %p36 = scmp.eq.s32.totalorder %s21, 0
      %p37 = por %p35, %p36
      %p38 = scmp.ne.s32.totalorder %s26, %s27
      %p39 = scmp.eq.s32.totalorder %s22, 2
      %p40 = por %p38, %p39
      %p42 = scmp.ne.s32.totalorder %s27, %s41
      %p43 = scmp.eq.s32.totalorder %s22, 0
      %p44 = por %p42, %p43
      %s45 = ssub.s32 %s16, %s23
      %p46 = scmp.eq.s32.totalorder %s45, 0
      %s48 = sadd.s32 %s47, 1
      %s49 = scalar_select %p46, %s47, %s48
      %p52 = pneg %p46
      %p53 = scmp.eq.s32.totalorder %s16, 2
      %p54 = por %p52, %p53
      %p55 = scmp.ne.s32.totalorder %s47, %s50
      %p56 = scmp.eq.s32.totalorder %s16, 0
      %p57 = por %p55, %p56
      %p58 = scmp.ne.s32.totalorder %s47, %s50
      %p59 = scmp.eq.s32.totalorder %s21, 2
      %p60 = por %p58, %p59
      %p61 = scmp.ne.s32.totalorder %s50, %s51
      %p62 = scmp.eq.s32.totalorder %s21, 0
      %p63 = por %p61, %p62
      %p64 = scmp.ne.s32.totalorder %s50, %s51
      %p65 = scmp.eq.s32.totalorder %s22, 2
      %p66 = por %p64, %p65
      %p68 = scmp.ne.s32.totalorder %s51, %s67
      %p69 = scmp.eq.s32.totalorder %s22, 0
      %p70 = por %p68, %p69
      %s72 = sadd.s32 %s71, 1
      %p75 = scmp.eq.s32.totalorder %s16, 2
      %p76 = scmp.ne.s32.totalorder %s71, %s73
      %p77 = scmp.eq.s32.totalorder %s16, 0
      %p78 = por %p76, %p77
      %p79 = scmp.ne.s32.totalorder %s71, %s73
      %p80 = scmp.eq.s32.totalorder %s21, 2
      %p81 = por %p79, %p80
      %p82 = scmp.ne.s32.totalorder %s73, %s74
      %p83 = scmp.eq.s32.totalorder %s21, 0
      %p84 = por %p82, %p83
      %p85 = scmp.ne.s32.totalorder %s73, %s74
      %p86 = scmp.eq.s32.totalorder %s22, 2
      %p87 = por %p85, %p86
      %p89 = scmp.ne.s32.totalorder %s74, %s88
      %p90 = scmp.eq.s32.totalorder %s22, 0
      %p91 = por %p89, %p90
      %s93 = sadd.s32 %s92, 1
      %p96 = scmp.eq.s32.totalorder %s16, 2
      %p97 = scmp.ne.s32.totalorder %s92, %s94
      %p98 = scmp.eq.s32.totalorder %s16, 0
      %p99 = por %p97, %p98
      %p100 = scmp.ne.s32.totalorder %s92, %s94
      %p101 = scmp.eq.s32.totalorder %s21, 2
      %p102 = por %p100, %p101
      %p103 = scmp.ne.s32.totalorder %s94, %s95
      %p104 = scmp.eq.s32.totalorder %s21, 0
      %p105 = por %p103, %p104
      %p106 = scmp.ne.s32.totalorder %s94, %s95
      %p107 = scmp.eq.s32.totalorder %s22, 2
      %p108 = por %p106, %p107
      %p110 = scmp.ne.s32.totalorder %s95, %s109
      %p111 = scmp.eq.s32.totalorder %s22, 0
      %p112 = por %p110, %p111
      %s114 = sadd.s32 %s113, 1
      %p117 = scmp.eq.s32.totalorder %s16, 2
      %p118 = scmp.ne.s32.totalorder %s113, %s115
      %p119 = scmp.eq.s32.totalorder %s16, 0
      %p120 = por %p118, %p119
      %p121 = scmp.ne.s32.totalorder %s113, %s115
      %p122 = scmp.eq.s32.totalorder %s21, 2
      %p123 = por %p121, %p122
      %p124 = scmp.ne.s32.totalorder %s115, %s116
      %p125 = scmp.eq.s32.totalorder %s21, 0
      %p126 = por %p124, %p125
      %p127 = scmp.ne.s32.totalorder %s115, %s116
      %p128 = scmp.eq.s32.totalorder %s22, 2
      %p129 = por %p127, %p128
      %p131 = scmp.ne.s32.totalorder %s116, %s130
      %p132 = scmp.eq.s32.totalorder %s22, 0
      %p133 = por %p131, %p132
      %s134 = ssub.s32 %s16, %s23
      %p135 = scmp.eq.s32.totalorder %s134, 0
      %s137 = sadd.s32 %s136, 1
      %s138 = scalar_select %p135, %s136, %s137
      %p141 = pneg %p135
      %p142 = scmp.eq.s32.totalorder %s16, 2
      %p143 = por %p141, %p142
      %p144 = scmp.ne.s32.totalorder %s136, %s139
      %p145 = scmp.eq.s32.totalorder %s16, 0
      %p146 = por %p144, %p145
      %p147 = scmp.ne.s32.totalorder %s136, %s139
      %p148 = scmp.eq.s32.totalorder %s21, 2
      %p149 = por %p147, %p148
      %p150 = scmp.ne.s32.totalorder %s139, %s140
      %p151 = scmp.eq.s32.totalorder %s21, 0
      %p152 = por %p150, %p151
      %p153 = scmp.ne.s32.totalorder %s139, %s140
      %p154 = scmp.eq.s32.totalorder %s22, 2
      %p155 = por %p153, %p154
      %p157 = scmp.ne.s32.totalorder %s140, %s156
      %p158 = scmp.eq.s32.totalorder %s22, 0
      %p159 = por %p157, %p158
      %p160 = scmp.le.s32.totalorder 1, %s16
      %p161 = scmp.lt.s32.totalorder %s16, 4
      %p162 = pnand %p160, %p161
      %p163 = pneg %p162
      // Predicated region
      $region9: #{tpu_custom_call.1} parent=5 // pred_check
        _
      $region10: #{tpu_custom_call.1} parent=5 // pred_check_branch
        %165 = sbr.rel (%p162) target = $region12
      $region11: #{tpu_custom_call.1} parent=5 // pred_region
        %s166 = ssub.s32 %s16, 1
        // Predicated region
        $region13: #{tpu_custom_call.1} parent=11 // pred_check
          %p167 = pneg %p37
        $region14: #{tpu_custom_call.1} parent=11 // pred_check_branch
          %169 = sbr.rel (%p167) target = $region16
        $region15: #{tpu_custom_call.1} parent=11 // pred_region
          _
        $region16: #{tpu_custom_call.1} parent=11 // pred_fallthru
          _
        // Predicated region
        $region17: #{tpu_custom_call.1} parent=11 // pred_check
          %p170 = pneg %p84
        $region18: #{tpu_custom_call.1} parent=11 // pred_check_branch
          %172 = sbr.rel (%p170) target = $region20
        $region19: #{tpu_custom_call.1} parent=11 // pred_region
          %s174 = ssub.s32 1024, 1024
          %175 = vsyncadd [#allocation6], %s174
          %s176 = sshll.u32 [#allocation5], 4
          %s177 = int_to_ptr.vmem [resolvable:$true] %s176
          %182 = dma.hbm_to_vmem [thread:$0]  %s2, 1024, %s177, [#allocation6], 64, 64, 4
        $region20: #{tpu_custom_call.1} parent=11 // pred_fallthru
          _
        // Predicated region
        $region21: #{tpu_custom_call.1} parent=11 // pred_check
          %p183 = pneg %p105
        $region22: #{tpu_custom_call.1} parent=11 // pred_check_branch
          %185 = sbr.rel (%p183) target = $region24
        $region23: #{tpu_custom_call.1} parent=11 // pred_region
          _
        $region24: #{tpu_custom_call.1} parent=11 // pred_fallthru
          _
        // Predicated region
        $region25: #{tpu_custom_call.1} parent=11 // pred_check
          %p186 = pneg %p126
        $region26: #{tpu_custom_call.1} parent=11 // pred_check_branch
          %188 = sbr.rel (%p186) target = $region28
        $region27: #{tpu_custom_call.1} parent=11 // pred_region
          _
        $region28: #{tpu_custom_call.1} parent=11 // pred_fallthru
          _
      $region12: #{tpu_custom_call.1} parent=5 // pred_fallthru
        _
      %p189 = scmp.lt.s32.totalorder %s16, 3
      // Predicated region
      $region29: #{tpu_custom_call.1} parent=5 // pred_check
        %p190 = pneg %p189
      $region30: #{tpu_custom_call.1} parent=5 // pred_check_branch
        %192 = sbr.rel (%p190) target = $region32
      $region31: #{tpu_custom_call.1} parent=5 // pred_region
        // Predicated region
        $region33: #{tpu_custom_call.1} parent=31 // pred_check
          %p193 = pneg %p57
        $region34: #{tpu_custom_call.1} parent=31 // pred_check_branch
          %195 = sbr.rel (%p193) target = $region36
        $region35: #{tpu_custom_call.1} parent=31 // pred_region
          %s196 = sand.u32 %s47, 1
          %s197 = scalar_lea.sflag [#allocation4], %s196
          %s198 = sand.u32 %s47, 1
          %s199 = smul.addr %s198, 8
          %s200 = scalar_lea.vmem [#allocation3], %s199
          %s202 = ssub.s32 128, 128
          %203 = vsyncadd %s197, %s202
          %s204 = smul.addr %s16, 128
          %s205 = scalar_lea.hbm %s1, %s204
          %s207 = sshll.u32 %s200, 4
          %s208 = int_to_ptr.vmem [resolvable:$true] %s207
          %210 = dma.hbm_to_vmem [thread:$0]  %s205, 128, %s208, %s197
        $region36: #{tpu_custom_call.1} parent=31 // pred_fallthru
          _
      $region32: #{tpu_custom_call.1} parent=5 // pred_fallthru
        _
      %p211 = scmp.le.s32.totalorder 1, %s16
      %p212 = scmp.lt.s32.totalorder %s16, 4
      %p213 = pnand %p211, %p212
      %p214 = pneg %p213
      // Predicated region
      $region37: #{tpu_custom_call.1} parent=5 // pred_check
        _
      $region38: #{tpu_custom_call.1} parent=5 // pred_check_branch
        %216 = sbr.rel (%p213) target = $region40
      $region39: #{tpu_custom_call.1} parent=5 // pred_region
        %s217 = ssub.s32 %s16, 1
        %s218 = sand.u32 %s50, 1
        %s219 = scalar_lea.sflag [#allocation4], %s218
        %s220 = sand.u32 %s50, 1
        %s221 = smul.addr %s220, 8
        %s222 = scalar_lea.vmem [#allocation3], %s221
        // Predicated region
        $region41: #{tpu_custom_call.1} parent=39 // pred_check
          %p223 = pneg %p63
        $region42: #{tpu_custom_call.1} parent=39 // pred_check_branch
          %225 = sbr.rel (%p223) target = $region44
        $region43: #{tpu_custom_call.1} parent=39 // pred_region
          %226 = dma.done %s219, 128
        $region44: #{tpu_custom_call.1} parent=39 // pred_fallthru
          _
        // Predicated region
        $region45: #{tpu_custom_call.1} parent=39 // pred_check
          %p227 = pneg %p84
        $region46: #{tpu_custom_call.1} parent=39 // pred_check_branch
          %229 = sbr.rel (%p227) target = $region48
        $region47: #{tpu_custom_call.1} parent=39 // pred_region
          %230 = dma.done [#allocation6], 1024
        $region48: #{tpu_custom_call.1} parent=39 // pred_fallthru
          _
        %p231 = pneg %p37
        %p232 = pneg %p34
        %s233 = sand.u32 %s50, 1
        %s234 = scalar_lea.sflag [#allocation4], %s233
        %s235 = sand.u32 %s50, 1
        %s236 = smul.addr %s235, 8
        %s237 = scalar_lea.vmem [#allocation3], %s236
        %p238 = pneg %p63
        %p239 = pneg %p60
        %p240 = pneg %p84
        %p241 = pneg %p81
        %p242 = pneg %p105
        %p243 = pneg %p102
        %p244 = pneg %p126
        %p245 = pneg %p123
        %p246 = pneg %p152
        %p247 = pneg %p149
        %p248 = scmp.lt.s32.totalorder %s21, 2
        %s249 = scalar_select %p248, %s21, 2
        %s250 = smul.addr %s249, 8
        %s251 = scalar_lea.vmem %s5, %s250
        %p252 = scmp.lt.s32.totalorder %s21, 2
        %s253 = scalar_select %p252, %s21, 2
        %s254 = smul.addr %s253, 8
        %s255 = scalar_lea.vmem %s5, %s254
        %v257 = vld [vmem:[%s222] sm:$0xff]
        %v258 = vpack.c.bf16 %v257, %v257
        %v259 = vld [vmem:[#allocation5] sm:$0xf]
        %v260 = vld [vmem:[#allocation5 + $0x4] sm:$0xf]
        %v261 = vld [vmem:[#allocation5 + $0x8] sm:$0xf]
        %v262 = vld [vmem:[#allocation5 + $0xc] sm:$0xf]
        %v263 = vld [vmem:[#allocation5 + $0x10] sm:$0xf]
        %v264 = vld [vmem:[#allocation5 + $0x14] sm:$0xf]
        %v265 = vld [vmem:[#allocation5 + $0x18] sm:$0xf]
        %v266 = vld [vmem:[#allocation5 + $0x1c] sm:$0xf]
        %v267 = vld [vmem:[#allocation5 + $0x20] sm:$0xf]
        %v268 = vld [vmem:[#allocation5 + $0x24] sm:$0xf]
        %v269 = vld [vmem:[#allocation5 + $0x28] sm:$0xf]
        %v270 = vld [vmem:[#allocation5 + $0x2c] sm:$0xf]
        %v271 = vld [vmem:[#allocation5 + $0x30] sm:$0xf]
        %v272 = vld [vmem:[#allocation5 + $0x34] sm:$0xf]
        %v273 = vld [vmem:[#allocation5 + $0x38] sm:$0xf]
        %v274 = vld [vmem:[#allocation5 + $0x3c] sm:$0xf]
        %v275 = vld [vmem:[%s3] sm:$0x1]
        %v277 = vlaneseq
        %v278 = vshrl.u32 %v277, 7
        %v279 = vsub.s32 0, %v278
        %v280 = vrot.slane %v275, %v279
        %v298 = vunpack.c.l.b16 %v259
        %v299 = vunpack.c.l.b16 %v260
        %v300 = vunpack.c.l.b16 %v261
        %v301 = vunpack.c.l.b16 %v262
        %v302 = vunpack.c.l.b16 %v263
        %v303 = vunpack.c.l.b16 %v264
        %v304 = vunpack.c.l.b16 %v265
        %v305 = vunpack.c.l.b16 %v266
        %v306 = vunpack.c.l.b16 %v267
        %v307 = vunpack.c.l.b16 %v268
        %v308 = vunpack.c.l.b16 %v269
        %v309 = vunpack.c.l.b16 %v270
        %v310 = vunpack.c.l.b16 %v271
        %v311 = vunpack.c.l.b16 %v272
        %v312 = vunpack.c.l.b16 %v273
        %v313 = vunpack.c.l.b16 %v274
        %v314 = vpack.c.b16 %v299, %v298
        %v315 = vpack.c.b16 %v301, %v300
        %v316 = vpack.c.b16 %v303, %v302
        %v317 = vpack.c.b16 %v305, %v304
        %v318 = vpack.c.b16 %v307, %v306
        %v319 = vpack.c.b16 %v309, %v308
        %v320 = vpack.c.b16 %v311, %v310
        %v321 = vpack.c.b16 %v313, %v312
        %330 = vmatprep.subr.bf16.mxu0 0
        %331 = vmatpush1.bf16.msra.mxu0 %v314
        %332 = vmatprep.subr.bf16.mxu0 0
        %333 = vmatpush1.bf16.msra.mxu0 %v315
        %334 = vmatprep.subr.bf16.mxu0 0
        %335 = vmatpush1.bf16.msra.mxu0 %v316
        %336 = vmatprep.subr.bf16.mxu0 0
        %337 = vmatpush1.bf16.msra.mxu0 %v317
        %338 = vmatprep.subr.bf16.mxu0 0
        %339 = vmatpush1.bf16.msra.mxu0 %v318
        %340 = vmatprep.subr.bf16.mxu0 0
        %341 = vmatpush1.bf16.msra.mxu0 %v319
        %342 = vmatprep.subr.bf16.mxu0 0
        %343 = vmatpush1.bf16.msra.mxu0 %v320
        %344 = vmatprep.subr.bf16.mxu0 0
        %345 = vmatpush1.bf16.msra.mxu0 %v321
        %346 = vmatprep.subr.bf16.mxu0 0
        %347 = vmatpush1.bf16.msra.mxu0 0
        %348 = vmatprep.subr.bf16.mxu0 0
        %349 = vmatpush1.bf16.msra.mxu0 0
        %350 = vmatprep.subr.bf16.mxu0 0
        %351 = vmatpush1.bf16.msra.mxu0 0
        %352 = vmatprep.subr.bf16.mxu0 0
        %353 = vmatpush1.bf16.msra.mxu0 0
        %354 = vmatprep.subr.bf16.mxu0 0
        %355 = vmatpush1.bf16.msra.mxu0 0
        %356 = vmatprep.subr.bf16.mxu0 0
        %357 = vmatpush1.bf16.msra.mxu0 0
        %358 = vmatprep.subr.bf16.mxu0 0
        %359 = vmatpush1.bf16.msra.mxu0 0
        %360 = vmatprep.subr.bf16.mxu0 0
        %361 = vmatpush1.bf16.msra.mxu0 0
        %362 = vmatprep.mubr.bf16.mxu0 0
        %363 = vmatmul.mubr.bf16.gmra.mrb[0].mxu0 %v258
        %v364 = vpop.f32.mrb[0].mxu0
        %v365 = vadd.f32 %v280, %v364
        %v366 = vpop.f32.mrb[0].mxu0
        %v367 = vpop.f32.mrb[0].mxu0
        %v368 = vpop.f32.mrb[0].mxu0
        %369 = vdwg.mxu0
        %v370 = vmax.f32 %v365, 0.0
        %v371 = vld [vmem:[%s4] sm:$0x1]
        %v373 = vlaneseq
        %v374 = vshrl.u32 %v373, 7
        %v375 = vsub.s32 0, %v374
        %v376 = vrot.slane %v371, %v375
        %v378 = vmul.f32 %v370, %v376
        %379 = vadd.xlane.f32.xlu0 %v378
        %v380 = vpop.xlane.xlu0 %379
        %s381 = sld [smem:[#allocation2]]
        %v382 = vstv %s381
        %v383 = vadd.f32 %v380, %v382
        %vm384 = vcmask 7168
        %385 = vst.msk [vmem:[%s255] sm:$0xff] %vm384, %v383
        %p386 = scmp.lt.s32.totalorder %s21, 2
        %s387 = scalar_select %p386, %s21, 2
        %s388 = smul.addr %s387, 8
        %s389 = scalar_lea.vmem %s5, %s388
        // Predicated region
        $region49: #{tpu_custom_call.1} parent=39 // pred_check
          %p390 = pneg %p149
        $region50: #{tpu_custom_call.1} parent=39 // pred_check_branch
          %392 = sbr.rel (%p390) target = $region52
        $region51: #{tpu_custom_call.1} parent=39 // pred_region
          _
        $region52: #{tpu_custom_call.1} parent=39 // pred_fallthru
          _
      $region40: #{tpu_custom_call.1} parent=5 // pred_fallthru
        _
      %p393 = scmp.le.s32.totalorder 2, %s16
      // Predicated region
      $region53: #{tpu_custom_call.1} parent=5 // pred_check
        %p394 = pneg %p393
      $region54: #{tpu_custom_call.1} parent=5 // pred_check_branch
        %396 = sbr.rel (%p394) target = $region56
      $region55: #{tpu_custom_call.1} parent=5 // pred_region
        %s397 = ssub.s32 %s16, 2
        // Predicated region
        $region57: #{tpu_custom_call.1} parent=55 // pred_check
          %p398 = pneg %p155
        $region58: #{tpu_custom_call.1} parent=55 // pred_check_branch
          %400 = sbr.rel (%p398) target = $region60
        $region59: #{tpu_custom_call.1} parent=55 // pred_region
          %p401 = scmp.lt.s32.totalorder %s22, 2
          %s402 = scalar_select %p401, %s22, 2
          %s403 = smul.addr %s402, 8
          %s404 = scalar_lea.vmem %s5, %s403
        $region60: #{tpu_custom_call.1} parent=55 // pred_fallthru
          _
      $region56: #{tpu_custom_call.1} parent=5 // pred_fallthru
        _
    $region6: #{tpu_custom_call.1} parent=1 // loop_footer
      %s20 = sadd.s32 1, %s16
    $region7: #{tpu_custom_call.1} parent=1 // loop_footer_branch
      %15 = sbr.rel target = $region3
    $region8: #{tpu_custom_call.1} parent=1 // loop_exit
      _
    %405 = vsyncpa [#allocation4], 1
    %s406 = scalar_lea.sflag [#allocation4], 1
    %407 = vsyncpa %s406, 1
    %408 = vsyncpa [#allocation6], 1

</llo_original>
